<compile_context>
chip_gen: v7x
topology: tpu7x:2x2x1
jax: 0.10.0
libtpu: 0.0.40
codegen_flags: <defaults>
</compile_context>

<pallas_src>
import jax
import jax.numpy as jnp
import numpy as np
from jax.experimental import pallas as pl
from jax.experimental.pallas import tpu as pltpu

# Abramowitz & Stegun 7.1.26 erf approximation constants (max abs err 1.5e-7).
_ERF_P = 0.3275911
_ERF_A1 = 0.254829592
_ERF_A2 = -0.284496736
_ERF_A3 = 1.421413741
_ERF_A4 = -1.453152027
_ERF_A5 = 1.061405429
_INV_SQRT2 = 0.7071067811865476


def _erf(x):
    ax = jnp.abs(x)
    t = 1.0 / (1.0 + _ERF_P * ax)
    poly = ((((_ERF_A5 * t + _ERF_A4) * t + _ERF_A3) * t + _ERF_A2) * t + _ERF_A1) * t
    y = 1.0 - poly * jnp.exp(-ax * ax)
    return jnp.where(x >= 0.0, y, -y)


def _gelu_exact(x):
    # 0.5 * x * (1 + erf(x / sqrt(2)))  -- PyTorch nn.GELU() default semantics.
    return 0.5 * x * (1.0 + _erf(x * _INV_SQRT2))


def feedforward_kernel(x_ref, w1_ref, b1_ref, w2_ref, b2_ref, o_ref):
    # x_ref : (TM, D)   w1_ref : (D, H)   b1_ref : (1, H)
    # w2_ref: (H, D)    b2_ref : (1, D)   o_ref  : (TM, D)
    x = x_ref[...]
    h = jnp.dot(x, w1_ref[...], preferred_element_type=jnp.float32) + b1_ref[...]
    g = _gelu_exact(h)
    y = jnp.dot(g, w2_ref[...], preferred_element_type=jnp.float32) + b2_ref[...]
    o_ref[...] = y.astype(o_ref.dtype)


def _round_up(n, m):
    return ((n + m - 1) // m) * m


def feedforward_forward(x, params, *, tile_m=512):
    """x: (B, S, D) float32 (same layout as the PyTorch module). Returns (B, S, D)."""
    B, S, D = x.shape
    H = params['b1'].shape[0]

    # nn.Linear stores W as (out, in); transpose once (tiny) so the kernel does x @ W.
    w1 = jnp.transpose(params['w1']).astype(jnp.float32)   # (D, H)
    w2 = jnp.transpose(params['w2']).astype(jnp.float32)   # (H, D)
    b1 = params['b1'].reshape(1, H).astype(jnp.float32)
    b2 = params['b2'].reshape(1, D).astype(jnp.float32)

    M = B * S
    x_flat = x.reshape(M, D).astype(jnp.float32)            # contiguous reshape only

    tm = min(tile_m, _round_up(M, 8))                        # tile rows, multiple of 8
    m_pad = _round_up(M, tm)
    if m_pad != M:
        x_flat = jnp.pad(x_flat, ((0, m_pad - M), (0, 0)))   # padded rows are inert

    grid = (m_pad // tm,)

    # Per-step VMEM estimate: double-buffered x/out tiles + resident weights +
    # a few (TM, H) intermediates; generous headroom, capped under v7x budget.
    est = 4 * (2 * tm * D + 2 * tm * D
               + 2 * (D * H + H + H * D + D)
               + 4 * tm * H)
    vmem_limit = int(min(max(2 * est, 8 << 20), 32 << 20))

    out = pl.pallas_call(
        feedforward_kernel,
        out_shape=jax.ShapeDtypeStruct((m_pad, D), jnp.float32),
        grid=grid,
        in_specs=[
            pl.BlockSpec((tm, D), lambda i: (i, 0)),   # token tile (pipelined)
            pl.BlockSpec((D, H), lambda i: (0, 0)),    # W1 (resident)
            pl.BlockSpec((1, H), lambda i: (0, 0)),    # b1
            pl.BlockSpec((H, D), lambda i: (0, 0)),    # W2 (resident)
            pl.BlockSpec((1, D), lambda i: (0, 0)),    # b2
        ],
        out_specs=pl.BlockSpec((tm, D), lambda i: (i, 0)),
        compiler_params=pltpu.CompilerParams(
            dimension_semantics=("parallel",),
            vmem_limit_bytes=vmem_limit,
        ),
    )(x_flat, w1, b1, w2, b2)

    return out[:M].reshape(B, S, D)


# ----------------------- pure-JAX reference (for checking) -----------------------
def ref_forward(x, params):
    h = jnp.einsum('bsd,hd->bsh', x, params['w1']) + params['b1']
    h = jax.nn.gelu(h, approximate=False)                    # exact erf GELU
    y = jnp.einsum('bsh,dh->bsd', h, params['w2']) + params['b2']
    return y                                                  # Dropout = identity (eval)


def init_params(key, dim, hidden):
    k1, k2, k3, k4 = jax.random.split(key, 4)
    return {
        'w1': 0.2 * jax.random.normal(k1, (hidden, dim), jnp.float32),   # (out, in)
        'b1': 0.1 * jax.random.normal(k2, (hidden,), jnp.float32),
        'w2': 0.2 * jax.random.normal(k3, (dim, hidden), jnp.float32),   # (out, in)
        'b2': 0.1 * jax.random.normal(k4, (dim,), jnp.float32),
    }


if __name__ == "__main__":
    key = jax.random.PRNGKey(0)
    k_x, k_p = jax.random.split(key)

    # Small shapes consistent with the module: dim = input_channels = 4.
    B, S, D, H = 2, 16, 4, 32
    x = jax.random.normal(k_x, (B, S, D), jnp.float32)
    params = init_params(k_p, D, H)

    out = feedforward_forward(x, params)
    out = jax.block_until_ready(out)

    ref = ref_forward(x, params)
    np.testing.assert_allclose(np.asarray(out), np.asarray(ref), rtol=1e-4, atol=1e-4)

    print("KERNEL_OK")
</pallas_src>

<mosaic_0001>
module attributes {stable_mosaic.version = 11 : i64} {
  func.func @feedforward_kernel(%arg0: i32, %arg1: memref<32x4xf32, #tpu.memory_space<vmem>>, %arg2: memref<4x32xf32, #tpu.memory_space<vmem>>, %arg3: memref<1x32xf32, #tpu.memory_space<vmem>>, %arg4: memref<32x4xf32, #tpu.memory_space<vmem>>, %arg5: memref<1x4xf32, #tpu.memory_space<vmem>>, %arg6: memref<32x4xf32, #tpu.memory_space<vmem>>) attributes {dimension_semantics = [#tpu.dimension_semantics<parallel>], iteration_bounds = array<i64: 1>, scalar_prefetch = 0 : i64, scratch_operands = 0 : i64, tpu.core_type = #tpu.core_type<tc>, window_params = [{transform_indices = @transform_0, window_bounds = array<i64: 32, 4>}, {pipeline_mode = #tpu.pipeline_mode<synchronous>, transform_indices = @transform_1, window_bounds = array<i64: 4, 32>}, {pipeline_mode = #tpu.pipeline_mode<synchronous>, transform_indices = @transform_2, window_bounds = array<i64: 1, 32>}, {pipeline_mode = #tpu.pipeline_mode<synchronous>, transform_indices = @transform_3, window_bounds = array<i64: 32, 4>}, {pipeline_mode = #tpu.pipeline_mode<synchronous>, transform_indices = @transform_4, window_bounds = array<i64: 1, 4>}, {transform_indices = @transform_5, window_bounds = array<i64: 32, 4>}]} {
    %c0 = arith.constant 0 : index
    %c0_0 = arith.constant 0 : index
    %0 = vector.load %arg1[%c0, %c0_0] : memref<32x4xf32, #tpu.memory_space<vmem>>, vector<32x4xf32>
    %c0_1 = arith.constant 0 : index
    %c0_2 = arith.constant 0 : index
    %1 = vector.load %arg2[%c0_1, %c0_2] : memref<4x32xf32, #tpu.memory_space<vmem>>, vector<4x32xf32>
    %cst = arith.constant dense<0.000000e+00> : vector<32x32xf32>
    %2 = tpu.matmul %0, %1, %cst {dimension_numbers = #tpu.dot_dimension_numbers<[1], [0], [0], [1], [0, 0, 1, 1], [], []>} : vector<32x4xf32>, vector<4x32xf32>, vector<32x32xf32> -> vector<32x32xf32>
    %c0_3 = arith.constant 0 : index
    %c0_4 = arith.constant 0 : index
    %3 = vector.load %arg3[%c0_3, %c0_4] : memref<1x32xf32, #tpu.memory_space<vmem>>, vector<1x32xf32>
    %4 = vector.broadcast %3 : vector<1x32xf32> to vector<32x32xf32>
    %5 = arith.addf %2, %4 : vector<32x32xf32>
    %cst_5 = arith.constant 5.000000e-01 : f32
    %6 = vector.broadcast %cst_5 : f32 to vector<32x32xf32>
    %7 = arith.mulf %6, %5 : vector<32x32xf32>
    %cst_6 = arith.constant 0.707106769 : f32
    %8 = vector.broadcast %cst_6 : f32 to vector<32x32xf32>
    %9 = arith.mulf %5, %8 : vector<32x32xf32>
    %10 = math.absf %9 : vector<32x32xf32>
    %cst_7 = arith.constant 0.327591091 : f32
    %11 = vector.broadcast %cst_7 : f32 to vector<32x32xf32>
    %12 = arith.mulf %11, %10 : vector<32x32xf32>
    %cst_8 = arith.constant 1.000000e+00 : f32
    %13 = vector.broadcast %cst_8 : f32 to vector<32x32xf32>
    %14 = arith.addf %13, %12 : vector<32x32xf32>
    %cst_9 = arith.constant 1.000000e+00 : f32
    %15 = vector.broadcast %cst_9 : f32 to vector<32x32xf32>
    %16 = arith.divf %15, %14 : vector<32x32xf32>
    %cst_10 = arith.constant 1.06140542 : f32
    %17 = vector.broadcast %cst_10 : f32 to vector<32x32xf32>
    %18 = arith.mulf %17, %16 : vector<32x32xf32>
    %cst_11 = arith.constant -1.45315206 : f32
    %19 = vector.broadcast %cst_11 : f32 to vector<32x32xf32>
    %20 = arith.addf %18, %19 : vector<32x32xf32>
    %21 = arith.mulf %20, %16 : vector<32x32xf32>
    %cst_12 = arith.constant 1.42141378 : f32
    %22 = vector.broadcast %cst_12 : f32 to vector<32x32xf32>
    %23 = arith.addf %21, %22 : vector<32x32xf32>
    %24 = arith.mulf %23, %16 : vector<32x32xf32>
    %cst_13 = arith.constant -0.284496725 : f32
    %25 = vector.broadcast %cst_13 : f32 to vector<32x32xf32>
    %26 = arith.addf %24, %25 : vector<32x32xf32>
    %27 = arith.mulf %26, %16 : vector<32x32xf32>
    %cst_14 = arith.constant 0.254829586 : f32
    %28 = vector.broadcast %cst_14 : f32 to vector<32x32xf32>
    %29 = arith.addf %27, %28 : vector<32x32xf32>
    %30 = arith.mulf %29, %16 : vector<32x32xf32>
    %cst_15 = arith.constant 0.000000e+00 : f32
    %31 = vector.broadcast %cst_15 : f32 to vector<32x32xf32>
    %32 = arith.subf %31, %10 : vector<32x32xf32>
    %33 = arith.mulf %32, %10 : vector<32x32xf32>
    %34 = math.exp %33 : vector<32x32xf32>
    %35 = arith.mulf %30, %34 : vector<32x32xf32>
    %cst_16 = arith.constant 1.000000e+00 : f32
    %36 = vector.broadcast %cst_16 : f32 to vector<32x32xf32>
    %37 = arith.subf %36, %35 : vector<32x32xf32>
    %cst_17 = arith.constant 0.000000e+00 : f32
    %38 = vector.broadcast %cst_17 : f32 to vector<32x32xf32>
    %39 = arith.cmpf oge, %9, %38 : vector<32x32xf32>
    %cst_18 = arith.constant 0.000000e+00 : f32
    %40 = vector.broadcast %cst_18 : f32 to vector<32x32xf32>
    %41 = arith.subf %40, %37 : vector<32x32xf32>
    %42 = arith.select %39, %37, %41 : vector<32x32xi1>, vector<32x32xf32>
    %cst_19 = arith.constant 1.000000e+00 : f32
    %43 = vector.broadcast %cst_19 : f32 to vector<32x32xf32>
    %44 = arith.addf %43, %42 : vector<32x32xf32>
    %45 = arith.mulf %7, %44 : vector<32x32xf32>
    %c0_20 = arith.constant 0 : index
    %c0_21 = arith.constant 0 : index
    %46 = vector.load %arg4[%c0_20, %c0_21] : memref<32x4xf32, #tpu.memory_space<vmem>>, vector<32x4xf32>
    %cst_22 = arith.constant dense<0.000000e+00> : vector<32x4xf32>
    %47 = tpu.matmul %45, %46, %cst_22 {dimension_numbers = #tpu.dot_dimension_numbers<[1], [0], [0], [1], [0, 0, 1, 1], [], []>} : vector<32x32xf32>, vector<32x4xf32>, vector<32x4xf32> -> vector<32x4xf32>
    %c0_23 = arith.constant 0 : index
    %c0_24 = arith.constant 0 : index
    %48 = vector.load %arg5[%c0_23, %c0_24] : memref<1x4xf32, #tpu.memory_space<vmem>>, vector<1x4xf32>
    %49 = vector.broadcast %48 : vector<1x4xf32> to vector<32x4xf32>
    %50 = arith.addf %47, %49 : vector<32x4xf32>
    %c0_25 = arith.constant 0 : index
    %c0_26 = arith.constant 0 : index
    %51 = vector.load %arg6[%c0_25, %c0_26] : memref<32x4xf32, #tpu.memory_space<vmem>>, vector<32x4xf32>
    tpu.vector_store %arg6[%c0_25, %c0_26], %50 {strides = array<i32>} : memref<32x4xf32, #tpu.memory_space<vmem>>, vector<32x4xf32>,
    return
  }
  func.func @transform_0(%arg0: i32) -> (i32, i32) {
    %c0_i32 = arith.constant 0 : i32
    %c0_i32_0 = arith.constant 0 : i32
    return %arg0, %c0_i32 : i32, i32
  }
  func.func @transform_1(%arg0: i32) -> (i32, i32) {
    %c0_i32 = arith.constant 0 : i32
    %c0_i32_0 = arith.constant 0 : i32
    %c0_i32_1 = arith.constant 0 : i32
    return %c0_i32, %c0_i32_0 : i32, i32
  }
  func.func @transform_2(%arg0: i32) -> (i32, i32) {
    %c0_i32 = arith.constant 0 : i32
    %c0_i32_0 = arith.constant 0 : i32
    %c0_i32_1 = arith.constant 0 : i32
    return %c0_i32, %c0_i32_0 : i32, i32
  }
  func.func @transform_3(%arg0: i32) -> (i32, i32) {
    %c0_i32 = arith.constant 0 : i32
    %c0_i32_0 = arith.constant 0 : i32
    %c0_i32_1 = arith.constant 0 : i32
    return %c0_i32, %c0_i32_0 : i32, i32
  }
  func.func @transform_4(%arg0: i32) -> (i32, i32) {
    %c0_i32 = arith.constant 0 : i32
    %c0_i32_0 = arith.constant 0 : i32
    %c0_i32_1 = arith.constant 0 : i32
    return %c0_i32, %c0_i32_0 : i32, i32
  }
  func.func @transform_5(%arg0: i32) -> (i32, i32) {
    %c0_i32 = arith.constant 0 : i32
    %c0_i32_0 = arith.constant 0 : i32
    return %arg0, %c0_i32 : i32, i32
  }
}

</mosaic_0001>

<llo_original>
// kernel: tpu_custom_call.1
$region0: #{tpu_custom_call.1}
  #allocation0 [shape = 'u32[]', space=smem, size = 0x4, offset = 0x4, fixed_abs, tag = 'smem constant byte address 0x4 - core index']
  #allocation1 [shape = 'u32[144,128]{1,0:T(1,128)}', space=vmem, size = 0x12000, scoped, tag = 'internal scratch']
  %s0 = inlined_call_operand.vmem [shape: f32[32,4], index: 0, kind: input, shape index: {}]
  %s1 = inlined_call_operand.vmem [shape: f32[4,32], index: 1, kind: input, shape index: {}]
  %s2 = inlined_call_operand.vmem [shape: f32[1,32], index: 2, kind: input, shape index: {}]
  %s3 = inlined_call_operand.vmem [shape: f32[32,4], index: 3, kind: input, shape index: {}]
  %s4 = inlined_call_operand.vmem [shape: f32[1,4], index: 4, kind: input, shape index: {}]
  %s5 = inlined_call_operand.vmem [shape: f32[32,4], index: 5, kind: output, shape index: {}]
  %s6 = sld [smem:[#allocation0]]
  $region30: #{tpu_custom_call.1} parent=0
    _
  %s8 = ssub.s32 1, %s6
  %s9 = scalar_select 0, %s8, %s6
  // Predicated region
  $region2: #{tpu_custom_call.1} parent=0 // pred_check
    _
  $region3: #{tpu_custom_call.1} parent=0 // pred_check_branch
    %11 = sbr.rel (0) target = $region5
  $region4: #{tpu_custom_call.1} parent=0 // pred_region
    _
  $region5: #{tpu_custom_call.1} parent=0 // pred_fallthru
    _
  // Predicated region
  $region6: #{tpu_custom_call.1} parent=0 // pred_check
    _
  $region7: #{tpu_custom_call.1} parent=0 // pred_check_branch
    %13 = sbr.rel (0) target = $region9
  $region8: #{tpu_custom_call.1} parent=0 // pred_region
    _
  $region9: #{tpu_custom_call.1} parent=0 // pred_fallthru
    _
  // Predicated region
  $region10: #{tpu_custom_call.1} parent=0 // pred_check
    _
  $region11: #{tpu_custom_call.1} parent=0 // pred_check_branch
    %15 = sbr.rel (0) target = $region13
  $region12: #{tpu_custom_call.1} parent=0 // pred_region
    _
  $region13: #{tpu_custom_call.1} parent=0 // pred_fallthru
    _
  // Predicated region
  $region14: #{tpu_custom_call.1} parent=0 // pred_check
    _
  $region15: #{tpu_custom_call.1} parent=0 // pred_check_branch
    %17 = sbr.rel (0) target = $region17
  $region16: #{tpu_custom_call.1} parent=0 // pred_region
    _
  $region17: #{tpu_custom_call.1} parent=0 // pred_fallthru
    _
  // Predicated region
  $region18: #{tpu_custom_call.1} parent=0 // pred_check
    _
  $region19: #{tpu_custom_call.1} parent=0 // pred_check_branch
    %19 = sbr.rel (0) target = $region21
  $region20: #{tpu_custom_call.1} parent=0 // pred_region
    _
  $region21: #{tpu_custom_call.1} parent=0 // pred_fallthru
    _
  %v20 = vld [vmem:[%s0] sm:$0xff]
  %v21 = vld [vmem:[%s0 + $0x8] sm:$0xff]
  %v22 = vld [vmem:[%s0 + $0x10] sm:$0xff]
  %v23 = vld [vmem:[%s0 + $0x18] sm:$0xff]
  %v24 = vld [vmem:[%s1] sm:$0xf]
  %v25 = vld [vmem:[%s2] sm:$0x1]
  %v27 = vlaneseq
  %v28 = vshrl.u32 %v27, 7
  %v29 = vsub.s32 0, %v28
  %v30 = vrot.slane %v25, %v29
  %vm32 = vcmask 31744
  %v34 = vsel %vm32, %v20, 0
  %v37 = vsel %vm32, %v21, 0
  %v40 = vsel %vm32, %v22, 0
  %v43 = vsel %vm32, %v23, 0
  %vm45 = vcmask 1043456
  %v47 = vsel %vm45, %v24, 0
  %49 = vmatprep.subr.mxu0 0.0
  %50 = vmatpush1.msra.mxu0 %v47
  %51 = vmatprep.subr.mxu0 0.0
  %52 = vmatpush1.msra.mxu0 0.0
  %53 = vmatprep.subr.mxu0 0.0
  %54 = vmatpush1.msra.mxu0 0.0
  %55 = vmatprep.subr.mxu0 0.0
  %56 = vmatpush1.msra.mxu0 0.0
  %57 = vmatprep.subr.mxu0 0.0
  %58 = vmatpush1.msra.mxu0 0.0
  %59 = vmatprep.subr.mxu0 0.0
  %60 = vmatpush1.msra.mxu0 0.0
  %61 = vmatprep.subr.mxu0 0.0
  %62 = vmatpush1.msra.mxu0 0.0
  %63 = vmatprep.subr.mxu0 0.0
  %64 = vmatpush1.msra.mxu0 0.0
  %65 = vmatprep.subr.mxu0 0.0
  %66 = vmatpush1.msra.mxu0 0.0
  %67 = vmatprep.subr.mxu0 0.0
  %68 = vmatpush1.msra.mxu0 0.0
  %69 = vmatprep.subr.mxu0 0.0
  %70 = vmatpush1.msra.mxu0 0.0
  %71 = vmatprep.subr.mxu0 0.0
  %72 = vmatpush1.msra.mxu0 0.0
  %73 = vmatprep.subr.mxu0 0.0
  %74 = vmatpush1.msra.mxu0 0.0
  %75 = vmatprep.subr.mxu0 0.0
  %76 = vmatpush1.msra.mxu0 0.0
  %77 = vmatprep.subr.mxu0 0.0
  %78 = vmatpush1.msra.mxu0 0.0
  %79 = vmatprep.subr.mxu0 0.0
  %80 = vmatpush1.msra.mxu0 0.0
  %81 = vmatprep.subr.mxu0 0.0
  %82 = vmatpush1.msra.mxu0 0.0
  %83 = vmatprep.subr.mxu0 0.0
  %84 = vmatpush1.msra.mxu0 0.0
  %85 = vmatprep.subr.mxu0 0.0
  %86 = vmatpush1.msra.mxu0 0.0
  %87 = vmatprep.subr.mxu0 0.0
  %88 = vmatpush1.msra.mxu0 0.0
  %89 = vmatprep.subr.mxu0 0.0
  %90 = vmatpush1.msra.mxu0 0.0
  %91 = vmatprep.subr.mxu0 0.0
  %92 = vmatpush1.msra.mxu0 0.0
  %93 = vmatprep.subr.mxu0 0.0
  %94 = vmatpush1.msra.mxu0 0.0
  %95 = vmatprep.subr.mxu0 0.0
  %96 = vmatpush1.msra.mxu0 0.0
  %97 = vmatprep.subr.mxu0 0.0
  %98 = vmatpush1.msra.mxu0 0.0
  %99 = vmatprep.subr.mxu0 0.0
  %100 = vmatpush1.msra.mxu0 0.0
  %101 = vmatprep.subr.mxu0 0.0
  %102 = vmatpush1.msra.mxu0 0.0
  %103 = vmatprep.subr.mxu0 0.0
  %104 = vmatpush1.msra.mxu0 0.0
  %105 = vmatprep.subr.mxu0 0.0
  %106 = vmatpush1.msra.mxu0 0.0
  %107 = vmatprep.subr.mxu0 0.0
  %108 = vmatpush1.msra.mxu0 0.0
  %109 = vmatprep.subr.mxu0 0.0
  %110 = vmatpush1.msra.mxu0 0.0
  %111 = vmatprep.subr.mxu0 0.0
  %112 = vmatpush1.msra.mxu0 0.0
  %113 = vmatprep.mubr.f32.mxu0 0.0
  %114 = vmatmul.mubr.f32.gmra.mrb[0].mxu0 %v34
  %v115 = vpop.f32.mrb[0].mxu0
  %v116 = vadd.f32 %v30, %v115
  %v117 = vpop.f32.mrb[0].mxu0
  %118 = vmatprep.mubr.f32.mxu0 0.0
  %119 = vmatmul.mubr.f32.gmra.mrb[0].mxu0 %v37
  %v120 = vpop.f32.mrb[0].mxu0
  %v121 = vadd.f32 %v30, %v120
  %v122 = vpop.f32.mrb[0].mxu0
  %123 = vmatprep.mubr.f32.mxu0 0.0
  %124 = vmatmul.mubr.f32.gmra.mrb[0].mxu0 %v40
  %v125 = vpop.f32.mrb[0].mxu0
  %v126 = vadd.f32 %v30, %v125
  %v127 = vpop.f32.mrb[0].mxu0
  %128 = vmatprep.mubr.f32.mxu0 0.0
  %129 = vmatmul.mubr.f32.gmra.mrb[0].mxu0 %v43
  %v130 = vpop.f32.mrb[0].mxu0
  %v131 = vadd.f32 %v30, %v130
  %v132 = vpop.f32.mrb[0].mxu0
  %133 = vdwg.mxu0
  %v134 = vmul.f32 %v116, 0.5
  %v135 = vmul.f32 %v121, 0.5
  %v136 = vmul.f32 %v126, 0.5
  %v137 = vmul.f32 %v131, 0.5
  %v138 = vmul.f32 %v116, 0.70710677
  %v139 = vmul.f32 %v121, 0.70710677
  %v140 = vmul.f32 %v126, 0.70710677
  %v141 = vmul.f32 %v131, 0.70710677
  %v142 = vand.u32 2147483647, %v138
  %v143 = vand.u32 2147483647, %v139
  %v144 = vand.u32 2147483647, %v140
  %v145 = vand.u32 2147483647, %v141
  %v146 = vmul.f32 %v142, 0.3275911
  %v147 = vmul.f32 %v143, 0.3275911
  %v148 = vmul.f32 %v144, 0.3275911
  %v149 = vmul.f32 %v145, 0.3275911
  %v150 = vadd.f32 %v146, 1.0
  %v151 = vadd.f32 %v147, 1.0
  %v152 = vadd.f32 %v148, 1.0
  %v153 = vadd.f32 %v149, 1.0
  %v154 = vrcp.pop %v150
  %v155 = vmul.f32 1.0, %v154
  %v156 = vrcp.pop %v151
  %v157 = vmul.f32 1.0, %v156
  %v158 = vrcp.pop %v152
  %v159 = vmul.f32 1.0, %v158
  %v160 = vrcp.pop %v153
  %v161 = vmul.f32 1.0, %v160
  %v162 = vmul.f32 %v155, 1.0614054
  %v163 = vmul.f32 %v157, 1.0614054
  %v164 = vmul.f32 %v159, 1.0614054
  %v165 = vmul.f32 %v161, 1.0614054
  %v166 = vadd.f32 %v162, -1.4531521
  %v167 = vadd.f32 %v163, -1.4531521
  %v168 = vadd.f32 %v164, -1.4531521
  %v169 = vadd.f32 %v165, -1.4531521
  %v170 = vmul.f32 %v166, %v155
  %v171 = vmul.f32 %v167, %v157
  %v172 = vmul.f32 %v168, %v159
  %v173 = vmul.f32 %v169, %v161
  %v174 = vadd.f32 %v170, 1.4214138
  %v175 = vadd.f32 %v171, 1.4214138
  %v176 = vadd.f32 %v172, 1.4214138
  %v177 = vadd.f32 %v173, 1.4214138
  %v178 = vmul.f32 %v174, %v155
  %v179 = vmul.f32 %v175, %v157
  %v180 = vmul.f32 %v176, %v159
  %v181 = vmul.f32 %v177, %v161
  %v182 = vadd.f32 %v178, -0.28449672
  %v183 = vadd.f32 %v179, -0.28449672
  %v184 = vadd.f32 %v180, -0.28449672
  %v185 = vadd.f32 %v181, -0.28449672
  %v186 = vmul.f32 %v182, %v155
  %v187 = vmul.f32 %v183, %v157
  %v188 = vmul.f32 %v184, %v159
  %v189 = vmul.f32 %v185, %v161
  %v190 = vadd.f32 %v186, 0.2548296
  %v191 = vadd.f32 %v187, 0.2548296
  %v192 = vadd.f32 %v188, 0.2548296
  %v193 = vadd.f32 %v189, 0.2548296
  %v194 = vmul.f32 %v190, %v155
  %v195 = vmul.f32 %v191, %v157
  %v196 = vmul.f32 %v192, %v159
  %v197 = vmul.f32 %v193, %v161
  %v198 = vsub.f32 0.0, %v142
  %v199 = vsub.f32 0.0, %v143
  %v200 = vsub.f32 0.0, %v144
  %v201 = vsub.f32 0.0, %v145
  %v202 = vmul.f32 %v198, %v142
  %v203 = vmul.f32 %v199, %v143
  %v204 = vmul.f32 %v200, %v144
  %v205 = vmul.f32 %v201, %v145
  %v206 = vmul.f32 %v202, 1.442695
  %v207 = vpow.pop %v206
  %v208 = vmul.f32 %v203, 1.442695
  %v209 = vpow.pop %v208
  %v210 = vmul.f32 %v204, 1.442695
  %v211 = vpow.pop %v210
  %v212 = vmul.f32 %v205, 1.442695
  %v213 = vpow.pop %v212
  %v214 = vmul.f32 %v194, %v207
  %v215 = vmul.f32 %v195, %v209
  %v216 = vmul.f32 %v196, %v211
  %v217 = vmul.f32 %v197, %v213
  %v218 = vsub.f32 1.0, %v214
  %v219 = vsub.f32 1.0, %v215
  %v220 = vsub.f32 1.0, %v216
  %v221 = vsub.f32 1.0, %v217
  %vm222 = vcmp.ge.f32.partialorder %v138, 0.0
  %vm223 = vcmp.ge.f32.partialorder %v139, 0.0
  %vm224 = vcmp.ge.f32.partialorder %v140, 0.0
  %vm225 = vcmp.ge.f32.partialorder %v141, 0.0
  %v226 = vsub.f32 0.0, %v218
  %v227 = vsub.f32 0.0, %v219
  %v228 = vsub.f32 0.0, %v220
  %v229 = vsub.f32 0.0, %v221
  %v230 = vsel %vm222, %v218, %v226
  %v231 = vsel %vm223, %v219, %v227
  %v232 = vsel %vm224, %v220, %v228
  %v233 = vsel %vm225, %v221, %v229
  %v234 = vadd.f32 %v230, 1.0
  %v235 = vadd.f32 %v231, 1.0
  %v236 = vadd.f32 %v232, 1.0
  %v237 = vadd.f32 %v233, 1.0
  %v238 = vmul.f32 %v134, %v234
  %v239 = vmul.f32 %v135, %v235
  %v240 = vmul.f32 %v136, %v236
  %v241 = vmul.f32 %v137, %v237
  %v242 = vld [vmem:[%s3] sm:$0xff]
  %v243 = vld [vmem:[%s3 + $0x8] sm:$0xff]
  %v244 = vld [vmem:[%s3 + $0x10] sm:$0xff]
  %v245 = vld [vmem:[%s3 + $0x18] sm:$0xff]
  %v246 = vld [vmem:[%s4] sm:$0x1]
  %v248 = vlaneseq
  %v249 = vshrl.u32 %v248, 7
  %v250 = vsub.s32 0, %v249
  %v251 = vrot.slane %v246, %v250
  %vm253 = vcmask 261120
  %v255 = vsel %vm253, %v238, 0
  %v258 = vsel %vm253, %v239, 0
  %v261 = vsel %vm253, %v240, 0
  %v264 = vsel %vm253, %v241, 0
  %266 = vmatprep.subr.mxu0 0.0
  %267 = vmatpush1.msra.mxu0 %v242
  %268 = vmatprep.subr.mxu0 0.0
  %269 = vmatpush1.msra.mxu0 %v243
  %270 = vmatprep.subr.mxu0 0.0
  %271 = vmatpush1.msra.mxu0 %v244
  %272 = vmatprep.subr.mxu0 0.0
  %273 = vmatpush1.msra.mxu0 %v245
  %274 = vmatprep.subr.mxu0 0.0
  %275 = vmatpush1.msra.mxu0 0.0
  %276 = vmatprep.subr.mxu0 0.0
  %277 = vmatpush1.msra.mxu0 0.0
  %278 = vmatprep.subr.mxu0 0.0
  %279 = vmatpush1.msra.mxu0 0.0
  %280 = vmatprep.subr.mxu0 0.0
  %281 = vmatpush1.msra.mxu0 0.0
  %282 = vmatprep.subr.mxu0 0.0
  %283 = vmatpush1.msra.mxu0 0.0
  %284 = vmatprep.subr.mxu0 0.0
  %285 = vmatpush1.msra.mxu0 0.0
  %286 = vmatprep.subr.mxu0 0.0
  %287 = vmatpush1.msra.mxu0 0.0
  %288 = vmatprep.subr.mxu0 0.0
  %289 = vmatpush1.msra.mxu0 0.0
  %290 = vmatprep.subr.mxu0 0.0
  %291 = vmatpush1.msra.mxu0 0.0
  %292 = vmatprep.subr.mxu0 0.0
  %293 = vmatpush1.msra.mxu0 0.0
  %294 = vmatprep.subr.mxu0 0.0
  %295 = vmatpush1.msra.mxu0 0.0
  %296 = vmatprep.subr.mxu0 0.0
  %297 = vmatpush1.msra.mxu0 0.0
  %298 = vmatprep.subr.mxu0 0.0
  %299 = vmatpush1.msra.mxu0 0.0
  %300 = vmatprep.subr.mxu0 0.0
  %301 = vmatpush1.msra.mxu0 0.0
  %302 = vmatprep.subr.mxu0 0.0
  %303 = vmatpush1.msra.mxu0 0.0
  %304 = vmatprep.subr.mxu0 0.0
  %305 = vmatpush1.msra.mxu0 0.0
  %306 = vmatprep.subr.mxu0 0.0
  %307 = vmatpush1.msra.mxu0 0.0
  %308 = vmatprep.subr.mxu0 0.0
  %309 = vmatpush1.msra.mxu0 0.0
  %310 = vmatprep.subr.mxu0 0.0
  %311 = vmatpush1.msra.mxu0 0.0
  %312 = vmatprep.subr.mxu0 0.0
  %313 = vmatpush1.msra.mxu0 0.0
  %314 = vmatprep.subr.mxu0 0.0
  %315 = vmatpush1.msra.mxu0 0.0
  %316 = vmatprep.subr.mxu0 0.0
  %317 = vmatpush1.msra.mxu0 0.0
  %318 = vmatprep.subr.mxu0 0.0
  %319 = vmatpush1.msra.mxu0 0.0
  %320 = vmatprep.subr.mxu0 0.0
  %321 = vmatpush1.msra.mxu0 0.0
  %322 = vmatprep.subr.mxu0 0.0
  %323 = vmatpush1.msra.mxu0 0.0
  %324 = vmatprep.subr.mxu0 0.0
  %325 = vmatpush1.msra.mxu0 0.0
  %326 = vmatprep.subr.mxu0 0.0
  %327 = vmatpush1.msra.mxu0 0.0
  %328 = vmatprep.subr.mxu0 0.0
  %329 = vmatpush1.msra.mxu0 0.0
  %330 = vmatprep.mubr.f32.mxu0 0.0
  %331 = vmatmul.mubr.f32.gmra.mrb[0].mxu0 %v255
  %v332 = vpop.f32.mrb[0].mxu0
  %v333 = vadd.f32 %v251, %v332
  %v334 = vpop.f32.mrb[0].mxu0
  %335 = vmatprep.mubr.f32.mxu0 0.0
  %336 = vmatmul.mubr.f32.gmra.mrb[0].mxu0 %v258
  %v337 = vpop.f32.mrb[0].mxu0
  %v338 = vadd.f32 %v251, %v337
  %v339 = vpop.f32.mrb[0].mxu0
  %340 = vmatprep.mubr.f32.mxu0 0.0
  %341 = vmatmul.mubr.f32.gmra.mrb[0].mxu0 %v261
  %v342 = vpop.f32.mrb[0].mxu0
  %v343 = vadd.f32 %v251, %v342
  %v344 = vpop.f32.mrb[0].mxu0
  %345 = vmatprep.mubr.f32.mxu0 0.0
  %346 = vmatmul.mubr.f32.gmra.mrb[0].mxu0 %v264
  %v347 = vpop.f32.mrb[0].mxu0
  %v348 = vadd.f32 %v251, %v347
  %v349 = vpop.f32.mrb[0].mxu0
  %350 = vdwg.mxu0
  %351 = vst.msk [vmem:[%s5] sm:$0xff] %vm32, %v333
  %352 = vst.msk [vmem:[%s5 + $0x8] sm:$0xff] %vm32, %v338
  %353 = vst.msk [vmem:[%s5 + $0x10] sm:$0xff] %vm32, %v343
  %354 = vst.msk [vmem:[%s5 + $0x18] sm:$0xff] %vm32, %v348
  // Predicated region
  $region22: #{tpu_custom_call.1} parent=0 // pred_check
    _
  $region23: #{tpu_custom_call.1} parent=0 // pred_check_branch
    %356 = sbr.rel (0) target = $region25
  $region24: #{tpu_custom_call.1} parent=0 // pred_region
    _
  $region25: #{tpu_custom_call.1} parent=0 // pred_fallthru
    _
  // Predicated region
  $region26: #{tpu_custom_call.1} parent=0 // pred_check
    _
  $region27: #{tpu_custom_call.1} parent=0 // pred_check_branch
    %358 = sbr.rel (0) target = $region29
  $region28: #{tpu_custom_call.1} parent=0 // pred_region
    _
  $region29: #{tpu_custom_call.1} parent=0 // pred_fallthru
    _

</llo_original>
